<compile_context>
chip_gen: v5e
topology: v5e:2x2
jax: 0.10.0
libtpu: 0.0.40
codegen_flags: <defaults>
</compile_context>

<pallas_src>
import jax
import jax.numpy as jnp
from jax.experimental import pallas as pl
from jax.experimental.pallas import tpu as pltpu


def _round_up(x, m):
    return (x + m - 1) // m * m


def _mlp3_kernel(obs_ref, w1_ref, b1_ref, w2_ref, b2_ref, w3_ref, b3_ref,
                 o_ref):
    """Fused (Linear + tanh) x3 on one lane-packed batch tile.

    obs_ref : (tile_p, G*obs_dim)   G batch rows per packed row
    w1_ref  : (G*obs_dim, G*hidden) block-diagonal, neighbor slice folded in
    w2/w3   : (G*hidden, G*hidden)  block-diagonal
    b*      : (1, G*hidden)         group-tiled bias (f32)
    o_ref   : (tile_p, G*hidden)    lane-dense output
    """
    mxu = w1_ref.dtype
    x = obs_ref[...].astype(mxu)
    h = jnp.tanh(
        jnp.dot(x, w1_ref[...], preferred_element_type=jnp.float32)
        + b1_ref[...])
    h = jnp.tanh(
        jnp.dot(h.astype(mxu), w2_ref[...], preferred_element_type=jnp.float32)
        + b2_ref[...])
    h = jnp.tanh(
        jnp.dot(h.astype(mxu), w3_ref[...], preferred_element_type=jnp.float32)
        + b3_ref[...])
    o_ref[...] = h.astype(o_ref.dtype)


def pack_params(params, *, self_obs_dim, obs_dim, mxu_dtype=jnp.bfloat16):
    """Pre-pack the MLP weights for the lane-packed kernel (done once).

    Builds block-diagonal weights (G copies along the diagonal, G = 128 //
    hidden) with the neighbor-column window of the observation folded into W1
    (zero rows elsewhere) and group-tiled f32 biases.
    """
    w1, b1, w2, b2, w3, b3 = params
    in_dim, hidden = w1.shape
    groups = 128 // hidden if (hidden <= 128 and 128 % hidden == 0) else 1

    w1p = jnp.zeros((groups * obs_dim, groups * hidden), mxu_dtype)
    w2p = jnp.zeros((groups * hidden, groups * hidden), mxu_dtype)
    w3p = jnp.zeros((groups * hidden, groups * hidden), mxu_dtype)
    for g in range(groups):
        r1 = g * obs_dim + self_obs_dim
        c = g * hidden
        w1p = w1p.at[r1:r1 + in_dim, c:c + hidden].set(w1.astype(mxu_dtype))
        w2p = w2p.at[c:c + hidden, c:c + hidden].set(w2.astype(mxu_dtype))
        w3p = w3p.at[c:c + hidden, c:c + hidden].set(w3.astype(mxu_dtype))

    b1p = jnp.tile(b1.astype(jnp.float32).reshape(1, hidden), (1, groups))
    b2p = jnp.tile(b2.astype(jnp.float32).reshape(1, hidden), (1, groups))
    b3p = jnp.tile(b3.astype(jnp.float32).reshape(1, hidden), (1, groups))
    return (w1p, b1p, w2p, b2p, w3p, b3p), groups


def quad_neighborhood_encoder_mlp(obs, packed_params, groups, *, tile_b=2048):
    """Fused neighbor-encoder MLP forward, tiled over lane-packed batch rows.

    obs           : (batch, obs_dim) full observation rows. The packed W1
                    selects the neighbor column window, so no slice is needed.
                    NOTE: if the production obs_dim is much wider than
                    self_obs_dim + all_neighbor_obs_size, narrow obs to that
                    column window before calling to avoid streaming unused
                    columns.
    packed_params : output of pack_params(...) (precomputed once)
    groups        : lane-pack factor returned by pack_params
    """
    w1p, b1p, w2p, b2p, w3p, b3p = packed_params
    batch, obs_dim = obs.shape
    packed_in = groups * obs_dim
    packed_h = w1p.shape[1]
    hidden = packed_h // groups
    assert w1p.shape[0] == packed_in

    # Pad at most (groups - 1) rows, and only when the batch is not a multiple
    # of the lane-pack factor; typical RL batches need no copy at all.
    padded = _round_up(batch, groups)
    if padded != batch:
        obs = jnp.pad(obs, ((0, padded - batch), (0, 0)))
    rows = padded // groups

    # Contiguous reshape (bitcast, no HBM copy): G batch rows -> 1 packed row.
    obs_packed = obs.reshape(rows, packed_in)

    # Packed-row tile: big enough to amortize per-step pipeline overhead,
    # capped at ceil(rows/2) so the grid has >= 2 "parallel" steps whenever
    # there is enough work (keeps both v7x TensorCores busy).
    if rows <= 8:
        tile_p = rows
    else:
        tile_p = min(_round_up(max(tile_b // groups, 8), 8),
                     _round_up(rows, 8),
                     _round_up(pl.cdiv(rows, 2), 8))
    grid = (pl.cdiv(rows, tile_p),)

    itemsize = jnp.dtype(obs.dtype).itemsize
    weight_bytes = sum(int(p.size) * jnp.dtype(p.dtype).itemsize
                       for p in packed_params)
    cost = pl.CostEstimate(
        flops=2 * rows * (packed_in + 2 * packed_h) * packed_h,
        transcendentals=3 * rows * packed_h,
        bytes_accessed=rows * (packed_in + packed_h) * itemsize + weight_bytes,
    )

    out = pl.pallas_call(
        _mlp3_kernel,
        out_shape=jax.ShapeDtypeStruct((rows, packed_h), obs.dtype),
        grid_spec=pltpu.PrefetchScalarGridSpec(
            num_scalar_prefetch=0,
            grid=grid,
            in_specs=[
                # activations: tile over packed batch rows
                pl.BlockSpec((tile_p, packed_in), lambda i: (i, 0)),
                # packed weights / biases: full blocks, resident across steps
                pl.BlockSpec((packed_in, packed_h), lambda i: (0, 0)),
                pl.BlockSpec((1, packed_h), lambda i: (0, 0)),
                pl.BlockSpec((packed_h, packed_h), lambda i: (0, 0)),
                pl.BlockSpec((1, packed_h), lambda i: (0, 0)),
                pl.BlockSpec((packed_h, packed_h), lambda i: (0, 0)),
                pl.BlockSpec((1, packed_h), lambda i: (0, 0)),
            ],
            out_specs=pl.BlockSpec((tile_p, packed_h), lambda i: (i, 0)),
        ),
        compiler_params=pltpu.CompilerParams(
            dimension_semantics=("parallel",),
        ),
        cost_estimate=cost,
    )(obs_packed, w1p, b1p, w2p, b2p, w3p, b3p)

    # Contiguous reshape (free) back to per-row embeddings; drop pad rows.
    return out.reshape(padded, hidden)[:batch]


def init_params(key, in_dim, hidden, dtype=jnp.float32):
    """Deterministic synthetic parameters (PyTorch-Linear-like init, stored
    pre-transposed as [in, out] for x @ W)."""
    ks = jax.random.split(key, 6)

    def lin(kw, kb, fan_in, fan_out):
        bound = 1.0 / jnp.sqrt(fan_in)
        w = jax.random.uniform(kw, (fan_in, fan_out), dtype, -bound, bound)
        b = jax.random.uniform(kb, (1, fan_out), dtype, -bound, bound)
        return w, b

    w1, b1 = lin(ks[0], ks[1], in_dim, hidden)
    w2, b2 = lin(ks[2], ks[3], hidden, hidden)
    w3, b3 = lin(ks[4], ks[5], hidden, hidden)
    return (w1, b1, w2, b2, w3, b3)


def reference_forward(obs, params, *, self_obs_dim, all_neighbor_obs_size,
                      mxu_dtype=None):
    """Pure-JAX reference. If mxu_dtype is given, mirrors the kernel's
    operand cast (bf16 MXU inputs, f32 accumulation, f32 bias/tanh)."""
    w1, b1, w2, b2, w3, b3 = params
    x = obs[:, self_obs_dim:self_obs_dim + all_neighbor_obs_size]

    def dot(a, w):
        if mxu_dtype is not None:
            a = a.astype(mxu_dtype)
            w = w.astype(mxu_dtype)
        return jnp.dot(a, w, preferred_element_type=jnp.float32)

    h = jnp.tanh(dot(x, w1) + b1)
    h = jnp.tanh(dot(h, w2) + b2)
    h = jnp.tanh(dot(h, w3) + b3)
    return h.astype(obs.dtype)


if __name__ == "__main__":
    # Shapes consistent with the module:
    #   self_obs_dim=18, neighbor_obs_dim=6, num_use_neighbor_obs=3
    #   -> all_neighbor_obs_size = 18, neighbor_hidden_size = 32
    self_obs_dim = 18
    neighbor_obs_dim = 6
    num_use_neighbor_obs = 3
    all_neighbor_obs_size = neighbor_obs_dim * num_use_neighbor_obs  # 18
    neighbor_hidden_size = 32
    obs_dim = self_obs_dim + all_neighbor_obs_size                   # 36

    key = jax.random.PRNGKey(0)
    k_obs, k_par = jax.random.split(key)
    params = init_params(k_par, all_neighbor_obs_size, neighbor_hidden_size)
    packed, groups = pack_params(params, self_obs_dim=self_obs_dim,
                                 obs_dim=obs_dim, mxu_dtype=jnp.bfloat16)

    ok = True
    # batch=16: aligned; batch=13: exercises the pad-to-group tail path;
    # batch=300: ragged last block + >=2 grid steps (megacore path).
    for batch in (16, 13, 300):
        obs = jax.random.normal(
            jax.random.fold_in(k_obs, batch), (batch, obs_dim), jnp.float32)

        out = quad_neighborhood_encoder_mlp(obs, packed, groups, tile_b=2048)
        out = jax.block_until_ready(out)

        ref_bf16 = reference_forward(
            obs, params, self_obs_dim=self_obs_dim,
            all_neighbor_obs_size=all_neighbor_obs_size,
            mxu_dtype=jnp.bfloat16)
        ref_f32 = reference_forward(
            obs, params, self_obs_dim=self_obs_dim,
            all_neighbor_obs_size=all_neighbor_obs_size)

        ok &= out.shape == (batch, neighbor_hidden_size)
        # Tight check vs. a reference that mirrors the bf16 operand cast.
        ok &= bool(jnp.allclose(out, ref_bf16, atol=2e-3, rtol=2e-3))
        # Looser sanity bound vs. the full-f32 reference (bf16 MXU operands).
        ok &= bool(jnp.allclose(out, ref_f32, atol=1e-1, rtol=1e-1))

    assert ok
    print("KERNEL_OK")
</pallas_src>

<mosaic_0001>
module attributes {stable_mosaic.version = 11 : i64} {
  func.func @_mlp3_kernel(%arg0: i32, %arg1: memref<4x144xf32, #tpu.memory_space<vmem>>, %arg2: memref<144x128xbf16, #tpu.memory_space<vmem>>, %arg3: memref<1x128xf32, #tpu.memory_space<vmem>>, %arg4: memref<128x128xbf16, #tpu.memory_space<vmem>>, %arg5: memref<1x128xf32, #tpu.memory_space<vmem>>, %arg6: memref<128x128xbf16, #tpu.memory_space<vmem>>, %arg7: memref<1x128xf32, #tpu.memory_space<vmem>>, %arg8: memref<4x128xf32, #tpu.memory_space<vmem>>) attributes {dimension_semantics = [#tpu.dimension_semantics<parallel>], iteration_bounds = array<i64: 1>, scalar_prefetch = 0 : i64, scratch_operands = 0 : i64, tpu.core_type = #tpu.core_type<tc>, window_params = [{transform_indices = @transform_0, window_bounds = array<i64: 4, 144>}, {pipeline_mode = #tpu.pipeline_mode<synchronous>, transform_indices = @transform_1, window_bounds = array<i64: 144, 128>}, {pipeline_mode = #tpu.pipeline_mode<synchronous>, transform_indices = @transform_2, window_bounds = array<i64: 1, 128>}, {pipeline_mode = #tpu.pipeline_mode<synchronous>, transform_indices = @transform_3, window_bounds = array<i64: 128, 128>}, {pipeline_mode = #tpu.pipeline_mode<synchronous>, transform_indices = @transform_4, window_bounds = array<i64: 1, 128>}, {pipeline_mode = #tpu.pipeline_mode<synchronous>, transform_indices = @transform_5, window_bounds = array<i64: 128, 128>}, {pipeline_mode = #tpu.pipeline_mode<synchronous>, transform_indices = @transform_6, window_bounds = array<i64: 1, 128>}, {transform_indices = @transform_7, window_bounds = array<i64: 4, 128>}]} {
    %c0 = arith.constant 0 : index
    %c0_0 = arith.constant 0 : index
    %0 = vector.load %arg1[%c0, %c0_0] : memref<4x144xf32, #tpu.memory_space<vmem>>, vector<4x144xf32>
    %1 = arith.truncf %0 : vector<4x144xf32> to vector<4x144xbf16>
    %c0_1 = arith.constant 0 : index
    %c0_2 = arith.constant 0 : index
    %2 = vector.load %arg2[%c0_1, %c0_2] : memref<144x128xbf16, #tpu.memory_space<vmem>>, vector<144x128xbf16>
    %cst = arith.constant dense<0.000000e+00> : vector<4x128xf32>
    %3 = tpu.matmul %1, %2, %cst {dimension_numbers = #tpu.dot_dimension_numbers<[1], [0], [0], [1], [0, 0, 1, 1], [], []>} : vector<4x144xbf16>, vector<144x128xbf16>, vector<4x128xf32> -> vector<4x128xf32>
    %c0_3 = arith.constant 0 : index
    %c0_4 = arith.constant 0 : index
    %4 = vector.load %arg3[%c0_3, %c0_4] : memref<1x128xf32, #tpu.memory_space<vmem>>, vector<1x128xf32>
    %5 = vector.broadcast %4 : vector<1x128xf32> to vector<4x128xf32>
    %6 = arith.addf %3, %5 : vector<4x128xf32>
    %7 = math.tanh %6 : vector<4x128xf32>
    %8 = arith.truncf %7 : vector<4x128xf32> to vector<4x128xbf16>
    %c0_5 = arith.constant 0 : index
    %c0_6 = arith.constant 0 : index
    %9 = vector.load %arg4[%c0_5, %c0_6] : memref<128x128xbf16, #tpu.memory_space<vmem>>, vector<128x128xbf16>
    %cst_7 = arith.constant dense<0.000000e+00> : vector<4x128xf32>
    %10 = tpu.matmul %8, %9, %cst_7 {dimension_numbers = #tpu.dot_dimension_numbers<[1], [0], [0], [1], [0, 0, 1, 1], [], []>} : vector<4x128xbf16>, vector<128x128xbf16>, vector<4x128xf32> -> vector<4x128xf32>
    %c0_8 = arith.constant 0 : index
    %c0_9 = arith.constant 0 : index
    %11 = vector.load %arg5[%c0_8, %c0_9] : memref<1x128xf32, #tpu.memory_space<vmem>>, vector<1x128xf32>
    %12 = vector.broadcast %11 : vector<1x128xf32> to vector<4x128xf32>
    %13 = arith.addf %10, %12 : vector<4x128xf32>
    %14 = math.tanh %13 : vector<4x128xf32>
    %15 = arith.truncf %14 : vector<4x128xf32> to vector<4x128xbf16>
    %c0_10 = arith.constant 0 : index
    %c0_11 = arith.constant 0 : index
    %16 = vector.load %arg6[%c0_10, %c0_11] : memref<128x128xbf16, #tpu.memory_space<vmem>>, vector<128x128xbf16>
    %cst_12 = arith.constant dense<0.000000e+00> : vector<4x128xf32>
    %17 = tpu.matmul %15, %16, %cst_12 {dimension_numbers = #tpu.dot_dimension_numbers<[1], [0], [0], [1], [0, 0, 1, 1], [], []>} : vector<4x128xbf16>, vector<128x128xbf16>, vector<4x128xf32> -> vector<4x128xf32>
    %c0_13 = arith.constant 0 : index
    %c0_14 = arith.constant 0 : index
    %18 = vector.load %arg7[%c0_13, %c0_14] : memref<1x128xf32, #tpu.memory_space<vmem>>, vector<1x128xf32>
    %19 = vector.broadcast %18 : vector<1x128xf32> to vector<4x128xf32>
    %20 = arith.addf %17, %19 : vector<4x128xf32>
    %21 = math.tanh %20 : vector<4x128xf32>
    %c0_15 = arith.constant 0 : index
    %c0_16 = arith.constant 0 : index
    %22 = vector.load %arg8[%c0_15, %c0_16] : memref<4x128xf32, #tpu.memory_space<vmem>>, vector<4x128xf32>
    tpu.vector_store %arg8[%c0_15, %c0_16], %21 {strides = array<i32>} : memref<4x128xf32, #tpu.memory_space<vmem>>, vector<4x128xf32>,
    return
  }
  func.func @transform_0(%arg0: i32) -> (i32, i32) {
    %c0_i32 = arith.constant 0 : i32
    %c0_i32_0 = arith.constant 0 : i32
    return %arg0, %c0_i32 : i32, i32
  }
  func.func @transform_1(%arg0: i32) -> (i32, i32) {
    %c0_i32 = arith.constant 0 : i32
    %c0_i32_0 = arith.constant 0 : i32
    %c0_i32_1 = arith.constant 0 : i32
    return %c0_i32, %c0_i32_0 : i32, i32
  }
  func.func @transform_2(%arg0: i32) -> (i32, i32) {
    %c0_i32 = arith.constant 0 : i32
    %c0_i32_0 = arith.constant 0 : i32
    %c0_i32_1 = arith.constant 0 : i32
    return %c0_i32, %c0_i32_0 : i32, i32
  }
  func.func @transform_3(%arg0: i32) -> (i32, i32) {
    %c0_i32 = arith.constant 0 : i32
    %c0_i32_0 = arith.constant 0 : i32
    %c0_i32_1 = arith.constant 0 : i32
    return %c0_i32, %c0_i32_0 : i32, i32
  }
  func.func @transform_4(%arg0: i32) -> (i32, i32) {
    %c0_i32 = arith.constant 0 : i32
    %c0_i32_0 = arith.constant 0 : i32
    %c0_i32_1 = arith.constant 0 : i32
    return %c0_i32, %c0_i32_0 : i32, i32
  }
  func.func @transform_5(%arg0: i32) -> (i32, i32) {
    %c0_i32 = arith.constant 0 : i32
    %c0_i32_0 = arith.constant 0 : i32
    %c0_i32_1 = arith.constant 0 : i32
    return %c0_i32, %c0_i32_0 : i32, i32
  }
  func.func @transform_6(%arg0: i32) -> (i32, i32) {
    %c0_i32 = arith.constant 0 : i32
    %c0_i32_0 = arith.constant 0 : i32
    %c0_i32_1 = arith.constant 0 : i32
    return %c0_i32, %c0_i32_0 : i32, i32
  }
  func.func @transform_7(%arg0: i32) -> (i32, i32) {
    %c0_i32 = arith.constant 0 : i32
    %c0_i32_0 = arith.constant 0 : i32
    return %arg0, %c0_i32 : i32, i32
  }
}

</mosaic_0001>

<llo_original>
// kernel: tpu_custom_call.1
$region0: #{tpu_custom_call.1}
  #allocation0 [shape = 'u32[]', space=smem, size = 0x4, offset = 0x4, fixed_abs, tag = 'smem constant byte address 0x4 - core index']
  #allocation1 [shape = 'u32[72,128]{1,0:T(1,128)}', space=vmem, size = 0x9000, scoped, tag = 'internal scratch']
  %s0 = inlined_call_operand.hbm [shape: f32[4,144], index: 0, kind: input, shape index: {}]
  %s1 = inlined_call_operand.hbm [shape: bf16[144,128], index: 1, kind: input, shape index: {}]
  %s2 = inlined_call_operand.vmem [shape: f32[1,128], index: 2, kind: input, shape index: {}]
  %s3 = inlined_call_operand.hbm [shape: bf16[128,128], index: 3, kind: input, shape index: {}]
  %s4 = inlined_call_operand.vmem [shape: f32[1,128], index: 4, kind: input, shape index: {}]
  %s5 = inlined_call_operand.hbm [shape: bf16[128,128], index: 5, kind: input, shape index: {}]
  %s6 = inlined_call_operand.vmem [shape: f32[1,128], index: 6, kind: input, shape index: {}]
  %s7 = inlined_call_operand.hbm [shape: f32[4,128], index: 7, kind: output, shape index: {}]
  %s8 = sld [smem:[#allocation0]]
  $region54: #{tpu_custom_call.1} parent=0
    _
  %s10 = ssub.s32 1, %s8
  %s11 = scalar_select 0, %s10, %s8
  $region1: #{tpu_custom_call.1} parent=0
    #allocation2 [shape = 'u8[4096]{0}', space=vmem, size = 0x1000, scoped, tag = 'input window, operand 0, single buffered']
    #allocation3 [shape = 's32[1]{0}', space=sflag, size = 0x4, scoped, tag = 'scoped memory for tpu_custom_call.1']
    #allocation4 [shape = 's32[1]{0}', space=sflag, size = 0x4, scoped, tag = 'scoped memory for tpu_custom_call.1']
    #allocation5 [shape = 'u8[36864]{0}', space=vmem, size = 0x9000, scoped, tag = 'input window, operand 1, single buffered']
    #allocation6 [shape = 's32[1]{0}', space=sflag, size = 0x4, scoped, tag = 'scoped memory for tpu_custom_call.1']
    #allocation7 [shape = 'u8[32768]{0}', space=vmem, size = 0x8000, scoped, tag = 'input window, operand 3, single buffered']
    #allocation8 [shape = 'u8[32768]{0}', space=vmem, size = 0x8000, scoped, tag = 'input window, operand 5, single buffered']
    #allocation9 [shape = 's32[1]{0}', space=sflag, size = 0x4, scoped, tag = 'scoped memory for tpu_custom_call.1']
    #allocation10 [shape = 'u8[2048]{0}', space=vmem, size = 0x800, scoped, tag = 'output window, operand 0, single buffered']
    %12 = vsyncpa [#allocation3], 0
    %13 = vsyncpa [#allocation6], 0
    %14 = vsyncpa [#allocation9], 0
    %15 = vsyncpa [#allocation4], 0
    // Predicated region
    $region2: #{tpu_custom_call.1} parent=1 // pred_check
      _
    $region3: #{tpu_custom_call.1} parent=1 // pred_check_branch
      %17 = sbr.rel (0) target = $region5
    $region4: #{tpu_custom_call.1} parent=1 // pred_region
      %19 = vsyncadd [#allocation3], 0
      %s21 = sshll.u32 %s0, 4
      %s22 = int_to_ptr.hbm [resolvable:$true] %s21
      %s23 = sshll.u32 [#allocation2], 4
      %s24 = int_to_ptr.vmem [resolvable:$true] %s23
      %26 = dma.hbm_to_vmem [thread:$0]  %s22, 128, %s24, [#allocation3]
    $region5: #{tpu_custom_call.1} parent=1 // pred_fallthru
      _
    // Predicated region
    $region6: #{tpu_custom_call.1} parent=1 // pred_check
      _
    $region7: #{tpu_custom_call.1} parent=1 // pred_check_branch
      %28 = sbr.rel (0) target = $region9
    $region8: #{tpu_custom_call.1} parent=1 // pred_region
      %30 = vsyncadd [#allocation6], 0
      %s31 = sshll.u32 %s1, 4
      %s32 = int_to_ptr.hbm [resolvable:$true] %s31
      %s33 = sshll.u32 [#allocation5], 4
      %s34 = int_to_ptr.vmem [resolvable:$true] %s33
      %39 = dma.hbm_to_vmem [thread:$0]  %s32, 1152, %s34, [#allocation6], 64, 64, 4
    $region9: #{tpu_custom_call.1} parent=1 // pred_fallthru
      _
    // Predicated region
    $region10: #{tpu_custom_call.1} parent=1 // pred_check
      _
    $region11: #{tpu_custom_call.1} parent=1 // pred_check_branch
      %41 = sbr.rel (0) target = $region13
    $region12: #{tpu_custom_call.1} parent=1 // pred_region
      _
    $region13: #{tpu_custom_call.1} parent=1 // pred_fallthru
      _
    // Predicated region
    $region14: #{tpu_custom_call.1} parent=1 // pred_check
      _
    $region15: #{tpu_custom_call.1} parent=1 // pred_check_branch
      %43 = sbr.rel (0) target = $region17
    $region16: #{tpu_custom_call.1} parent=1 // pred_region
      %45 = vsyncadd [#allocation6], 0
      %s46 = sshll.u32 %s3, 4
      %s47 = int_to_ptr.hbm [resolvable:$true] %s46
      %s48 = sshll.u32 [#allocation7], 4
      %s49 = int_to_ptr.vmem [resolvable:$true] %s48
      %54 = dma.hbm_to_vmem [thread:$0]  %s47, 1024, %s49, [#allocation6], 64, 64, 4
    $region17: #{tpu_custom_call.1} parent=1 // pred_fallthru
      _
    // Predicated region
    $region18: #{tpu_custom_call.1} parent=1 // pred_check
      _
    $region19: #{tpu_custom_call.1} parent=1 // pred_check_branch
      %56 = sbr.rel (0) target = $region21
    $region20: #{tpu_custom_call.1} parent=1 // pred_region
      _
    $region21: #{tpu_custom_call.1} parent=1 // pred_fallthru
      _
    // Predicated region
    $region22: #{tpu_custom_call.1} parent=1 // pred_check
      _
    $region23: #{tpu_custom_call.1} parent=1 // pred_check_branch
      %58 = sbr.rel (0) target = $region25
    $region24: #{tpu_custom_call.1} parent=1 // pred_region
      %60 = vsyncadd [#allocation9], 0
      %s61 = sshll.u32 %s5, 4
      %s62 = int_to_ptr.hbm [resolvable:$true] %s61
      %s63 = sshll.u32 [#allocation8], 4
      %s64 = int_to_ptr.vmem [resolvable:$true] %s63
      %69 = dma.hbm_to_vmem [thread:$0]  %s62, 1024, %s64, [#allocation9], 64, 64, 4
    $region25: #{tpu_custom_call.1} parent=1 // pred_fallthru
      _
    // Predicated region
    $region26: #{tpu_custom_call.1} parent=1 // pred_check
      _
    $region27: #{tpu_custom_call.1} parent=1 // pred_check_branch
      %71 = sbr.rel (0) target = $region29
    $region28: #{tpu_custom_call.1} parent=1 // pred_region
      _
    $region29: #{tpu_custom_call.1} parent=1 // pred_fallthru
      _
    // Predicated region
    $region30: #{tpu_custom_call.1} parent=1 // pred_check
      _
    $region31: #{tpu_custom_call.1} parent=1 // pred_check_branch
      %73 = sbr.rel (0) target = $region33
    $region32: #{tpu_custom_call.1} parent=1 // pred_region
      %75 = dma.done [#allocation3], 128
    $region33: #{tpu_custom_call.1} parent=1 // pred_fallthru
      _
    // Predicated region
    $region34: #{tpu_custom_call.1} parent=1 // pred_check
      _
    $region35: #{tpu_custom_call.1} parent=1 // pred_check_branch
      %77 = sbr.rel (0) target = $region37
    $region36: #{tpu_custom_call.1} parent=1 // pred_region
      %79 = dma.done [#allocation6], 1152
    $region37: #{tpu_custom_call.1} parent=1 // pred_fallthru
      _
    // Predicated region
    $region38: #{tpu_custom_call.1} parent=1 // pred_check
      _
    $region39: #{tpu_custom_call.1} parent=1 // pred_check_branch
      %81 = sbr.rel (0) target = $region41
    $region40: #{tpu_custom_call.1} parent=1 // pred_region
      %83 = dma.done [#allocation6], 1024
    $region41: #{tpu_custom_call.1} parent=1 // pred_fallthru
      _
    // Predicated region
    $region42: #{tpu_custom_call.1} parent=1 // pred_check
      _
    $region43: #{tpu_custom_call.1} parent=1 // pred_check_branch
      %85 = sbr.rel (0) target = $region45
    $region44: #{tpu_custom_call.1} parent=1 // pred_region
      %87 = dma.done [#allocation9], 1024
    $region45: #{tpu_custom_call.1} parent=1 // pred_fallthru
      _
    %v89 = vld [vmem:[#allocation2] sm:$0xff]
    %91 = vst [vmem:[#allocation1] ss:$2 sm:$0xff] %v89
    %v92 = vld.sshfl [vmem:[#allocation1] sm:$0xff pattern:$0x75316420]
    %v93 = vld.sshfl [vmem:[#allocation1 + $0x8] sm:$0xff pattern:$0x75316420]
    %v96 = vpack.c.bf16 %v92, %v92
    %v97 = vpack.c.bf16 %v93, %v93
    %v98 = vld [vmem:[#allocation5] sm:$0xf]
    %v99 = vld [vmem:[#allocation5 + $0x4] sm:$0xf]
    %v100 = vld [vmem:[#allocation5 + $0x8] sm:$0xf]
    %v101 = vld [vmem:[#allocation5 + $0xc] sm:$0xf]
    %v102 = vld [vmem:[#allocation5 + $0x10] sm:$0xf]
    %v103 = vld [vmem:[#allocation5 + $0x14] sm:$0xf]
    %v104 = vld [vmem:[#allocation5 + $0x18] sm:$0xf]
    %v105 = vld [vmem:[#allocation5 + $0x1c] sm:$0xf]
    %v106 = vld [vmem:[#allocation5 + $0x20] sm:$0xf]
    %v107 = vld [vmem:[#allocation5 + $0x24] sm:$0xf]
    %v108 = vld [vmem:[#allocation5 + $0x28] sm:$0xf]
    %v109 = vld [vmem:[#allocation5 + $0x2c] sm:$0xf]
    %v110 = vld [vmem:[#allocation5 + $0x30] sm:$0xf]
    %v111 = vld [vmem:[#allocation5 + $0x34] sm:$0xf]
    %v112 = vld [vmem:[#allocation5 + $0x38] sm:$0xf]
    %v113 = vld [vmem:[#allocation5 + $0x3c] sm:$0xf]
    %v114 = vld [vmem:[#allocation5 + $0x40] sm:$0xf]
    %v115 = vld [vmem:[#allocation5 + $0x44] sm:$0xf]
    %v116 = vld [vmem:[%s2] sm:$0x1]
    %v118 = vperm.slane %v116, 0
    %v138 = vunpack.c.l.b16 %v98
    %v139 = vunpack.c.l.b16 %v99
    %v140 = vunpack.c.l.b16 %v100
    %v141 = vunpack.c.l.b16 %v101
    %v142 = vunpack.c.l.b16 %v102
    %v143 = vunpack.c.l.b16 %v103
    %v144 = vunpack.c.l.b16 %v104
    %v145 = vunpack.c.l.b16 %v105
    %v146 = vunpack.c.l.b16 %v106
    %v147 = vunpack.c.l.b16 %v107
    %v148 = vunpack.c.l.b16 %v108
    %v149 = vunpack.c.l.b16 %v109
    %v150 = vunpack.c.l.b16 %v110
    %v151 = vunpack.c.l.b16 %v111
    %v152 = vunpack.c.l.b16 %v112
    %v153 = vunpack.c.l.b16 %v113
    %v154 = vunpack.c.l.b16 %v114
    %v155 = vunpack.c.l.b16 %v115
    %v156 = vpack.c.b16 %v139, %v138
    %v157 = vpack.c.b16 %v141, %v140
    %v158 = vpack.c.b16 %v143, %v142
    %v159 = vpack.c.b16 %v145, %v144
    %v160 = vpack.c.b16 %v147, %v146
    %v161 = vpack.c.b16 %v149, %v148
    %v162 = vpack.c.b16 %v151, %v150
    %v163 = vpack.c.b16 %v153, %v152
    %v164 = vpack.c.b16 %v155, %v154
    %vm174 = vcmask 130048
    %v176 = vsel %vm174, %v97, 0
    %178 = vmatpush.bf16.msra.mxu0 %v163
    %179 = vmatpush.bf16.msra.mxu0 %v162
    %180 = vmatpush.bf16.msra.mxu0 %v161
    %181 = vmatpush.bf16.msra.mxu0 %v160
    %182 = vmatpush.bf16.msra.mxu0 %v159
    %183 = vmatpush.bf16.msra.mxu0 %v158
    %184 = vmatpush.bf16.msra.mxu0 %v157
    %185 = vmatpush.bf16.msra.mxu0 %v156
    %186 = vmatmul.bf16.gmra.mxu0 %v96
    %v187 = vpop.f32.mrf.mxu0
    %v188 = vadd.f32 %v118, %v187
    %v189 = vpop.f32.mrf.mxu0
    %190 = vdwg.mxu0
    %191 = vmatpush.bf16.msra.mxu0 0
    %192 = vmatpush.bf16.msra.mxu0 0
    %193 = vmatpush.bf16.msra.mxu0 0
    %194 = vmatpush.bf16.msra.mxu0 0
    %195 = vmatpush.bf16.msra.mxu0 0
    %196 = vmatpush.bf16.msra.mxu0 0
    %197 = vmatpush.bf16.msra.mxu0 0
    %198 = vmatpush.bf16.msra.mxu0 %v164
    %199 = vmatmul.bf16.gmra.mxu0 %v176
    %v200 = vpop.f32.mrf.mxu0
    %v201 = vadd.f32 %v188, %v200
    %v202 = vpop.f32.mrf.mxu0
    %203 = vdwg.mxu0
    %v204 = vtanh.pop %v201
    %v205 = vpack.c.bf16 %v204, %v204
    %v206 = vld [vmem:[#allocation7] sm:$0xf]
    %v207 = vld [vmem:[#allocation7 + $0x4] sm:$0xf]
    %v208 = vld [vmem:[#allocation7 + $0x8] sm:$0xf]
    %v209 = vld [vmem:[#allocation7 + $0xc] sm:$0xf]
    %v210 = vld [vmem:[#allocation7 + $0x10] sm:$0xf]
    %v211 = vld [vmem:[#allocation7 + $0x14] sm:$0xf]
    %v212 = vld [vmem:[#allocation7 + $0x18] sm:$0xf]
    %v213 = vld [vmem:[#allocation7 + $0x1c] sm:$0xf]
    %v214 = vld [vmem:[#allocation7 + $0x20] sm:$0xf]
    %v215 = vld [vmem:[#allocation7 + $0x24] sm:$0xf]
    %v216 = vld [vmem:[#allocation7 + $0x28] sm:$0xf]
    %v217 = vld [vmem:[#allocation7 + $0x2c] sm:$0xf]
    %v218 = vld [vmem:[#allocation7 + $0x30] sm:$0xf]
    %v219 = vld [vmem:[#allocation7 + $0x34] sm:$0xf]
    %v220 = vld [vmem:[#allocation7 + $0x38] sm:$0xf]
    %v221 = vld [vmem:[#allocation7 + $0x3c] sm:$0xf]
    %v222 = vld [vmem:[%s4] sm:$0x1]
    %v224 = vperm.slane %v222, 0
    %v242 = vunpack.c.l.b16 %v206
    %v243 = vunpack.c.l.b16 %v207
    %v244 = vunpack.c.l.b16 %v208
    %v245 = vunpack.c.l.b16 %v209
    %v246 = vunpack.c.l.b16 %v210
    %v247 = vunpack.c.l.b16 %v211
    %v248 = vunpack.c.l.b16 %v212
    %v249 = vunpack.c.l.b16 %v213
    %v250 = vunpack.c.l.b16 %v214
    %v251 = vunpack.c.l.b16 %v215
    %v252 = vunpack.c.l.b16 %v216
    %v253 = vunpack.c.l.b16 %v217
    %v254 = vunpack.c.l.b16 %v218
    %v255 = vunpack.c.l.b16 %v219
    %v256 = vunpack.c.l.b16 %v220
    %v257 = vunpack.c.l.b16 %v221
    %v258 = vpack.c.b16 %v243, %v242
    %v259 = vpack.c.b16 %v245, %v244
    %v260 = vpack.c.b16 %v247, %v246
    %v261 = vpack.c.b16 %v249, %v248
    %v262 = vpack.c.b16 %v251, %v250
    %v263 = vpack.c.b16 %v253, %v252
    %v264 = vpack.c.b16 %v255, %v254
    %v265 = vpack.c.b16 %v257, %v256
    %274 = vmatpush.bf16.msra.mxu0 %v265
    %275 = vmatpush.bf16.msra.mxu0 %v264
    %276 = vmatpush.bf16.msra.mxu0 %v263
    %277 = vmatpush.bf16.msra.mxu0 %v262
    %278 = vmatpush.bf16.msra.mxu0 %v261
    %279 = vmatpush.bf16.msra.mxu0 %v260
    %280 = vmatpush.bf16.msra.mxu0 %v259
    %281 = vmatpush.bf16.msra.mxu0 %v258
    %282 = vmatmul.bf16.gmra.mxu0 %v205
    %v283 = vpop.f32.mrf.mxu0
    %v284 = vadd.f32 %v224, %v283
    %v285 = vpop.f32.mrf.mxu0
    %286 = vdwg.mxu0
    %v287 = vtanh.pop %v284
    %v288 = vpack.c.bf16 %v287, %v287
    %v289 = vld [vmem:[#allocation8] sm:$0xf]
    %v290 = vld [vmem:[#allocation8 + $0x4] sm:$0xf]
    %v291 = vld [vmem:[#allocation8 + $0x8] sm:$0xf]
    %v292 = vld [vmem:[#allocation8 + $0xc] sm:$0xf]
    %v293 = vld [vmem:[#allocation8 + $0x10] sm:$0xf]
    %v294 = vld [vmem:[#allocation8 + $0x14] sm:$0xf]
    %v295 = vld [vmem:[#allocation8 + $0x18] sm:$0xf]
    %v296 = vld [vmem:[#allocation8 + $0x1c] sm:$0xf]
    %v297 = vld [vmem:[#allocation8 + $0x20] sm:$0xf]
    %v298 = vld [vmem:[#allocation8 + $0x24] sm:$0xf]
    %v299 = vld [vmem:[#allocation8 + $0x28] sm:$0xf]
    %v300 = vld [vmem:[#allocation8 + $0x2c] sm:$0xf]
    %v301 = vld [vmem:[#allocation8 + $0x30] sm:$0xf]
    %v302 = vld [vmem:[#allocation8 + $0x34] sm:$0xf]
    %v303 = vld [vmem:[#allocation8 + $0x38] sm:$0xf]
    %v304 = vld [vmem:[#allocation8 + $0x3c] sm:$0xf]
    %v305 = vld [vmem:[%s6] sm:$0x1]
    %v307 = vperm.slane %v305, 0
    %v325 = vunpack.c.l.b16 %v289
    %v326 = vunpack.c.l.b16 %v290
    %v327 = vunpack.c.l.b16 %v291
    %v328 = vunpack.c.l.b16 %v292
    %v329 = vunpack.c.l.b16 %v293
    %v330 = vunpack.c.l.b16 %v294
    %v331 = vunpack.c.l.b16 %v295
    %v332 = vunpack.c.l.b16 %v296
    %v333 = vunpack.c.l.b16 %v297
    %v334 = vunpack.c.l.b16 %v298
    %v335 = vunpack.c.l.b16 %v299
    %v336 = vunpack.c.l.b16 %v300
    %v337 = vunpack.c.l.b16 %v301
    %v338 = vunpack.c.l.b16 %v302
    %v339 = vunpack.c.l.b16 %v303
    %v340 = vunpack.c.l.b16 %v304
    %v341 = vpack.c.b16 %v326, %v325
    %v342 = vpack.c.b16 %v328, %v327
    %v343 = vpack.c.b16 %v330, %v329
    %v344 = vpack.c.b16 %v332, %v331
    %v345 = vpack.c.b16 %v334, %v333
    %v346 = vpack.c.b16 %v336, %v335
    %v347 = vpack.c.b16 %v338, %v337
    %v348 = vpack.c.b16 %v340, %v339
    %357 = vmatpush.bf16.msra.mxu0 %v348
    %358 = vmatpush.bf16.msra.mxu0 %v347
    %359 = vmatpush.bf16.msra.mxu0 %v346
    %360 = vmatpush.bf16.msra.mxu0 %v345
    %361 = vmatpush.bf16.msra.mxu0 %v344
    %362 = vmatpush.bf16.msra.mxu0 %v343
    %363 = vmatpush.bf16.msra.mxu0 %v342
    %364 = vmatpush.bf16.msra.mxu0 %v341
    %365 = vmatmul.bf16.gmra.mxu0 %v288
    %v366 = vpop.f32.mrf.mxu0
    %v367 = vadd.f32 %v307, %v366
    %v368 = vpop.f32.mrf.mxu0
    %369 = vdwg.mxu0
    %v370 = vtanh.pop %v367
    %371 = vst [vmem:[#allocation10] sm:$0xf] %v370
    // Predicated region
    $region46: #{tpu_custom_call.1} parent=1 // pred_check
      _
    $region47: #{tpu_custom_call.1} parent=1 // pred_check_branch
      %373 = sbr.rel (0) target = $region49
    $region48: #{tpu_custom_call.1} parent=1 // pred_region
      %375 = vsyncadd [#allocation4], 0
      %s377 = sshll.u32 [#allocation10], 4
      %s378 = int_to_ptr.vmem [resolvable:$true] %s377
      %s379 = sshll.u32 %s7, 4
      %s380 = int_to_ptr.hbm [resolvable:$true] %s379
      %382 = dma.vmem_to_hbm [thread:$0]  %s378, 64, %s380, [#allocation4]
    $region49: #{tpu_custom_call.1} parent=1 // pred_fallthru
      _
    // Predicated region
    $region50: #{tpu_custom_call.1} parent=1 // pred_check
      _
    $region51: #{tpu_custom_call.1} parent=1 // pred_check_branch
      %384 = sbr.rel (0) target = $region53
    $region52: #{tpu_custom_call.1} parent=1 // pred_region
      %386 = dma.done [#allocation4], 64
    $region53: #{tpu_custom_call.1} parent=1 // pred_fallthru
      _
    %387 = vsyncpa [#allocation3], 1
    %388 = vsyncpa [#allocation6], 1
    %389 = vsyncpa [#allocation9], 1
    %390 = vsyncpa [#allocation4], 1

</llo_original>
